<compile_context>
chip_gen: v5e
topology: v5e:2x2
jax: 0.10.0
libtpu: 0.0.40
codegen_flags: <defaults>
</compile_context>

<pallas_src>
import jax
import jax.numpy as jnp
from jax.experimental import pallas as pl
from jax.experimental.pallas import tpu as pltpu


def _round_up(x, m):
    return (x + m - 1) // m * m


def rnn_fc_kernel(x_ref, wih0_ref, b0_ref, whh0_ref, wih1_ref, whh1_ref,
                  b1_ref, wfc_ref, bfc_ref, out_ref, xw_ref, *, unroll):
    """Forward pass for one batch group: 2-layer tanh RNN over time, then FC.

    x_ref    : (T, Bg, D)   time-major inputs for this batch group
    wih0_ref : (D, Hp)      layer-0 input weights (pre-transposed, padded)
    b0_ref   : (1, Hp)      fused layer-0 bias (b_ih + b_hh)
    whh0_ref : (Hp, Hp)     layer-0 recurrent weights
    wih1_ref : (Hp, Hp)     layer-1 input weights
    whh1_ref : (Hp, Hp)     layer-1 recurrent weights
    b1_ref   : (1, Hp)      fused layer-1 bias
    wfc_ref  : (1, Hp)      fc weight row
    bfc_ref  : (1,)  SMEM   fc bias scalar
    out_ref  : (Bg, 128)    lane-dense output block; column 0 holds the result
    xw_ref   : (T*Bg, Hp)   VMEM scratch for the hoisted input projection

    NOTE: Hp below is the lane-PADDED hidden size, not the true hidden size.
    Padded hidden columns stay exactly zero throughout (weights/biases are
    zero-padded).  Padded *batch rows* do NOT stay zero after step 0 (they
    evolve as tanh(b0), ...) — this is benign because the recurrence is
    row-independent and the wrapper slices them off; never reduce across the
    batch axis inside this kernel.
    """
    T, Bg, D = x_ref.shape
    Hp = whh0_ref.shape[0]          # padded hidden size

    # ---- Hoisted non-recurrent input projection: one large MXU GEMM. ----
    # (T*Bg, D) @ (D, Hp) + b0, layer-0 bias folded in once.
    x2d = x_ref[...].reshape(T * Bg, D)
    xw_ref[...] = (jnp.dot(x2d, wih0_ref[...],
                           preferred_element_type=jnp.float32)
                   + b0_ref[...])

    # Hoist the layer-1 bias broadcast out of the loop (broadcast_in_dim is
    # not CSE'd, so doing it per-step would re-emit it every iteration).
    b1 = jnp.broadcast_to(b1_ref[...], (Bg, Hp))

    h_init = (jnp.zeros((Bg, Hp), jnp.float32),
              jnp.zeros((Bg, Hp), jnp.float32))

    def step(t, carry):
        h0_prev, h1_prev = carry
        row = pl.multiple_of(t * Bg, Bg)
        xw_t = xw_ref[pl.ds(row, Bg), :]                        # (Bg, Hp)
        # layer-1 recurrent matmul depends only on h1_{t-1}: schedulable in
        # parallel with layer-0 work of this step (no concat on the path).
        r1 = jnp.dot(h1_prev, whh1_ref[...],
                     preferred_element_type=jnp.float32)
        # layer 0: only the recurrent matmul remains on the serial path.
        h0 = jnp.tanh(xw_t + jnp.dot(h0_prev, whh0_ref[...],
                                     preferred_element_type=jnp.float32))
        # layer 1 (dropout=0.0).
        h1 = jnp.tanh(jnp.dot(h0, wih1_ref[...],
                              preferred_element_type=jnp.float32) + r1 + b1)
        return h0, h1

    # T is small and static: unroll so tanh (EUP) of step t can overlap with
    # the MXU work of step t+1.  Unroll factor is capped for large Bg so the
    # live h0/h1/xw_t tiles don't spill the 64-vreg file.
    _, h1_last = jax.lax.fori_loop(0, T, step, h_init, unroll=unroll)

    # FC head: avoid an N=1 MXU matmul; VPU multiply + lane reduction.
    fc = (jnp.sum(h1_last * wfc_ref[...], axis=-1, keepdims=True)
          + bfc_ref[0])                                          # (Bg, 1)
    # Lane-dense store: broadcast across the 128-lane output block so the
    # writeback is an unmasked vst; the wrapper keeps only column 0.
    out_ref[...] = jnp.broadcast_to(fc, out_ref.shape)


def init_params(key, input_dim, hidden_dim):
    """Deterministic init mirroring PyTorch's U(-1/sqrt(H), 1/sqrt(H)) scheme."""
    ks = jax.random.split(key, 11)
    bound = 1.0 / jnp.sqrt(hidden_dim)
    u = lambda k, shape: jax.random.uniform(k, shape, jnp.float32, -bound, bound)
    return {
        "w_ih_l0": u(ks[0], (hidden_dim, input_dim)),
        "w_hh_l0": u(ks[1], (hidden_dim, hidden_dim)),
        "b_ih_l0": u(ks[2], (hidden_dim,)),
        "b_hh_l0": u(ks[3], (hidden_dim,)),
        "w_ih_l1": u(ks[4], (hidden_dim, hidden_dim)),
        "w_hh_l1": u(ks[5], (hidden_dim, hidden_dim)),
        "b_ih_l1": u(ks[6], (hidden_dim,)),
        "b_hh_l1": u(ks[7], (hidden_dim,)),
        "fc_w": u(ks[8], (1, hidden_dim)),
        "fc_b": u(ks[9], (1,)),
    }


def _default_b_group(Bp):
    """Pick the batch-group size.

    - tiny batches: one group (no point paying grid-step overhead);
    - otherwise: two balanced groups (one per v7x TensorCore; a no-op split on
      single-TC v5e/v6e), capped at 128 rows/group so the unrolled time loop
      stays within the vreg file.
    """
    if Bp <= 16:
        return Bp
    return min(_round_up((Bp + 1) // 2, 8), 128)


def rnn_model_forward(x, params, *, b_group=None):
    """x: (B, T, D_in) float32 (batch_first, like the PyTorch module) -> (B, 1)."""
    import functools

    B, T, D = x.shape
    H = params["w_hh_l0"].shape[0]
    Hp = _round_up(H, 128)                        # lane-pad hidden dim
    Bp = _round_up(max(B, 8), 8)                  # sublane-pad batch
    if b_group is None:
        b_group = _default_b_group(Bp)
    b_group = min(_round_up(b_group, 8), 128)
    Bp = _round_up(Bp, b_group)                   # make groups divide evenly
    n_groups = Bp // b_group

    # Full unroll for small groups; partial unroll for big ones (vreg budget).
    unroll = True if b_group <= 64 else 2

    # Time-major, batch zero-padded.  (Tiny at these shapes; at scale this
    # transpose could be folded into the projection GEMM instead.)
    x_tm = jnp.transpose(x, (1, 0, 2)).astype(jnp.float32)      # (T, B, D)
    x_tm = jnp.pad(x_tm, ((0, 0), (0, Bp - B), (0, 0)))         # (T, Bp, D)

    def padded(w, shape):
        out = jnp.zeros(shape, jnp.float32)
        return out.at[:w.shape[0], :w.shape[1]].set(w.astype(jnp.float32))

    # Weights pre-transposed to (in, out) and zero-padded to lane width.
    # Zero padding is exact: padded hidden columns never become nonzero.
    wih0 = padded(params["w_ih_l0"].T, (D, Hp))                            # (D, Hp)
    b0 = padded((params["b_ih_l0"] + params["b_hh_l0"]).reshape(1, H), (1, Hp))
    whh0 = padded(params["w_hh_l0"].T, (Hp, Hp))
    wih1 = padded(params["w_ih_l1"].T, (Hp, Hp))
    whh1 = padded(params["w_hh_l1"].T, (Hp, Hp))
    b1 = padded((params["b_ih_l1"] + params["b_hh_l1"]).reshape(1, H), (1, Hp))
    wfc = padded(params["fc_w"].reshape(1, H), (1, Hp))                    # (1, Hp)
    bfc = params["fc_b"].reshape(1).astype(jnp.float32)                    # (1,)

    def full(shape):
        return pl.BlockSpec(shape, lambda g: (0,) * len(shape))

    # Rough VMEM budget (bytes); only raise the scoped limit when the default
    # (32 MiB) would not fit.  Weights use constant index_maps but are still
    # double-buffered by BlockSpec; at much larger Hp they should move to
    # memory_space=pl.ANY + one manual copy, and the xw scratch should be
    # chunked over time (v7x has only 64 MiB VMEM).
    est_vmem = 4 * (
        2 * T * b_group * D                       # x block (double-buffered)
        + T * b_group * Hp                        # xw scratch
        + 2 * (D * Hp + 3 * Hp * Hp + 3 * Hp      # weights + biases
               + b_group * 128)                   # output block
    )
    vmem_limit = None
    if est_vmem > 30 * 2**20:
        vmem_limit = min(int(est_vmem * 1.25), 100 * 2**20)

    out = pl.pallas_call(
        functools.partial(rnn_fc_kernel, unroll=unroll),
        out_shape=jax.ShapeDtypeStruct((Bp, 128), jnp.float32),
        grid=(n_groups,),
        in_specs=[
            pl.BlockSpec((T, b_group, D), lambda g: (0, g, 0)),   # x (time-major)
            full((D, Hp)),            # wih0
            full((1, Hp)),            # b0
            full((Hp, Hp)),           # whh0
            full((Hp, Hp)),           # wih1
            full((Hp, Hp)),           # whh1
            full((1, Hp)),            # b1
            full((1, Hp)),            # wfc
            pl.BlockSpec(memory_space=pltpu.MemorySpace.SMEM),    # fc bias scalar
        ],
        out_specs=pl.BlockSpec((b_group, 128), lambda g: (g, 0)),
        scratch_shapes=[pltpu.VMEM((T * b_group, Hp), jnp.float32)],
        compiler_params=pltpu.CompilerParams(
            dimension_semantics=("parallel",),    # batch groups -> megacore
            vmem_limit_bytes=vmem_limit),
    )(x_tm, wih0, b0, whh0, wih1, whh1, b1, wfc, bfc)

    return out[:B, :1]


def rnn_model_reference(x, params):
    """Pure-JAX reference implementing nn.RNN(tanh, 2 layers) + Linear."""
    B, T, D = x.shape
    H = params["w_hh_l0"].shape[0]
    h0 = jnp.zeros((B, H), jnp.float32)
    h1 = jnp.zeros((B, H), jnp.float32)
    for t in range(T):
        xt = x[:, t, :]
        h0 = jnp.tanh(xt @ params["w_ih_l0"].T + params["b_ih_l0"]
                      + h0 @ params["w_hh_l0"].T + params["b_hh_l0"])
        h1 = jnp.tanh(h0 @ params["w_ih_l1"].T + params["b_ih_l1"]
                      + h1 @ params["w_hh_l1"].T + params["b_hh_l1"])
    return h1 @ params["fc_w"].T + params["fc_b"]


if __name__ == "__main__":
    B, T, INPUT_DIM, HIDDEN_DIM = 2, 8, 16, 32

    key = jax.random.PRNGKey(0)
    k_x, k_p = jax.random.split(key)
    x = jax.random.normal(k_x, (B, T, INPUT_DIM), jnp.float32)
    params = init_params(k_p, INPUT_DIM, HIDDEN_DIM)

    fwd = jax.jit(rnn_model_forward)
    out = jax.block_until_ready(fwd(x, params))

    ref = rnn_model_reference(x, params)
    assert out.shape == (B, 1), out.shape
    assert jnp.allclose(out, ref, atol=1e-4, rtol=1e-4), (out, ref)

    print("KERNEL_OK")
</pallas_src>

<mosaic_0001>
module attributes {stable_mosaic.version = 11 : i64} {
  func.func @rnn_fc_kernel(%arg0: i32, %arg1: memref<8x8x16xf32, #tpu.memory_space<vmem>>, %arg2: memref<16x128xf32, #tpu.memory_space<vmem>>, %arg3: memref<1x128xf32, #tpu.memory_space<vmem>>, %arg4: memref<128x128xf32, #tpu.memory_space<vmem>>, %arg5: memref<128x128xf32, #tpu.memory_space<vmem>>, %arg6: memref<128x128xf32, #tpu.memory_space<vmem>>, %arg7: memref<1x128xf32, #tpu.memory_space<vmem>>, %arg8: memref<1x128xf32, #tpu.memory_space<vmem>>, %arg9: memref<1xf32, #tpu.memory_space<smem>>, %arg10: memref<8x128xf32, #tpu.memory_space<vmem>>, %arg11: memref<64x128xf32, #tpu.memory_space<vmem>>) attributes {dimension_semantics = [#tpu.dimension_semantics<parallel>], iteration_bounds = array<i64: 1>, scalar_prefetch = 0 : i64, scratch_operands = 1 : i64, tpu.core_type = #tpu.core_type<tc>, window_params = [{transform_indices = @transform_0, window_bounds = array<i64: 8, 8, 16>}, {pipeline_mode = #tpu.pipeline_mode<synchronous>, transform_indices = @transform_1, window_bounds = array<i64: 16, 128>}, {pipeline_mode = #tpu.pipeline_mode<synchronous>, transform_indices = @transform_2, window_bounds = array<i64: 1, 128>}, {pipeline_mode = #tpu.pipeline_mode<synchronous>, transform_indices = @transform_3, window_bounds = array<i64: 128, 128>}, {pipeline_mode = #tpu.pipeline_mode<synchronous>, transform_indices = @transform_4, window_bounds = array<i64: 128, 128>}, {pipeline_mode = #tpu.pipeline_mode<synchronous>, transform_indices = @transform_5, window_bounds = array<i64: 128, 128>}, {pipeline_mode = #tpu.pipeline_mode<synchronous>, transform_indices = @transform_6, window_bounds = array<i64: 1, 128>}, {pipeline_mode = #tpu.pipeline_mode<synchronous>, transform_indices = @transform_7, window_bounds = array<i64: 1, 128>}, {transform_indices = @transform_8, window_bounds = array<i64: 1>}, {transform_indices = @transform_9, window_bounds = array<i64: 8, 128>}]} {
    %c0 = arith.constant 0 : index
    %c0_0 = arith.constant 0 : index
    %c0_1 = arith.constant 0 : index
    %0 = vector.load %arg1[%c0, %c0_0, %c0_1] : memref<8x8x16xf32, #tpu.memory_space<vmem>>, vector<8x8x16xf32>
    %1 = vector.shape_cast %0 : vector<8x8x16xf32> to vector<64x16xf32>
    %c0_2 = arith.constant 0 : index
    %c0_3 = arith.constant 0 : index
    %2 = vector.load %arg2[%c0_2, %c0_3] : memref<16x128xf32, #tpu.memory_space<vmem>>, vector<16x128xf32>
    %cst = arith.constant dense<0.000000e+00> : vector<64x128xf32>
    %3 = tpu.matmul %1, %2, %cst {dimension_numbers = #tpu.dot_dimension_numbers<[1], [0], [0], [1], [0, 0, 1, 1], [], []>} : vector<64x16xf32>, vector<16x128xf32>, vector<64x128xf32> -> vector<64x128xf32>
    %c0_4 = arith.constant 0 : index
    %c0_5 = arith.constant 0 : index
    %4 = vector.load %arg3[%c0_4, %c0_5] : memref<1x128xf32, #tpu.memory_space<vmem>>, vector<1x128xf32>
    %5 = vector.broadcast %4 : vector<1x128xf32> to vector<64x128xf32>
    %6 = arith.addf %3, %5 : vector<64x128xf32>
    %c0_6 = arith.constant 0 : index
    %c0_7 = arith.constant 0 : index
    %7 = vector.load %arg11[%c0_6, %c0_7] : memref<64x128xf32, #tpu.memory_space<vmem>>, vector<64x128xf32>
    tpu.vector_store %arg11[%c0_6, %c0_7], %6 {strides = array<i32>} : memref<64x128xf32, #tpu.memory_space<vmem>>, vector<64x128xf32>,
    %c0_8 = arith.constant 0 : index
    %c0_9 = arith.constant 0 : index
    %8 = vector.load %arg7[%c0_8, %c0_9] : memref<1x128xf32, #tpu.memory_space<vmem>>, vector<1x128xf32>
    %9 = vector.shape_cast %8 : vector<1x128xf32> to vector<1x128xf32>
    %10 = vector.broadcast %9 : vector<1x128xf32> to vector<8x128xf32>
    %cst_10 = arith.constant 0.000000e+00 : f32
    %11 = vector.broadcast %cst_10 : f32 to vector<8x128xf32>
    %cst_11 = arith.constant 0.000000e+00 : f32
    %12 = vector.broadcast %cst_11 : f32 to vector<8x128xf32>
    %c0_i32 = arith.constant 0 : i32
    %c8_i32 = arith.constant 8 : i32
    %13 = arith.muli %c0_i32, %c8_i32 : i32
    %14 = tpu.assume_multiple %13, 8 : i32
    %15 = arith.index_cast %14 : i32 to index
    %c0_12 = arith.constant 0 : index
    %16 = vector.load %arg11[%15, %c0_12] : memref<64x128xf32, #tpu.memory_space<vmem>>, vector<8x128xf32>
    %c0_13 = arith.constant 0 : index
    %c0_14 = arith.constant 0 : index
    %17 = vector.load %arg6[%c0_13, %c0_14] : memref<128x128xf32, #tpu.memory_space<vmem>>, vector<128x128xf32>
    %cst_15 = arith.constant dense<0.000000e+00> : vector<8x128xf32>
    %18 = tpu.matmul %12, %17, %cst_15 {dimension_numbers = #tpu.dot_dimension_numbers<[1], [0], [0], [1], [0, 0, 1, 1], [], []>} : vector<8x128xf32>, vector<128x128xf32>, vector<8x128xf32> -> vector<8x128xf32>
    %c0_16 = arith.constant 0 : index
    %c0_17 = arith.constant 0 : index
    %19 = vector.load %arg4[%c0_16, %c0_17] : memref<128x128xf32, #tpu.memory_space<vmem>>, vector<128x128xf32>
    %cst_18 = arith.constant dense<0.000000e+00> : vector<8x128xf32>
    %20 = tpu.matmul %11, %19, %cst_18 {dimension_numbers = #tpu.dot_dimension_numbers<[1], [0], [0], [1], [0, 0, 1, 1], [], []>} : vector<8x128xf32>, vector<128x128xf32>, vector<8x128xf32> -> vector<8x128xf32>
    %21 = arith.addf %16, %20 : vector<8x128xf32>
    %22 = math.tanh %21 : vector<8x128xf32>
    %c0_19 = arith.constant 0 : index
    %c0_20 = arith.constant 0 : index
    %23 = vector.load %arg5[%c0_19, %c0_20] : memref<128x128xf32, #tpu.memory_space<vmem>>, vector<128x128xf32>
    %cst_21 = arith.constant dense<0.000000e+00> : vector<8x128xf32>
    %24 = tpu.matmul %22, %23, %cst_21 {dimension_numbers = #tpu.dot_dimension_numbers<[1], [0], [0], [1], [0, 0, 1, 1], [], []>} : vector<8x128xf32>, vector<128x128xf32>, vector<8x128xf32> -> vector<8x128xf32>
    %25 = arith.addf %24, %18 : vector<8x128xf32>
    %26 = arith.addf %25, %10 : vector<8x128xf32>
    %27 = math.tanh %26 : vector<8x128xf32>
    %c1_i32 = arith.constant 1 : i32
    %c8_i32_22 = arith.constant 8 : i32
    %28 = arith.muli %c1_i32, %c8_i32_22 : i32
    %29 = tpu.assume_multiple %28, 8 : i32
    %30 = arith.index_cast %29 : i32 to index
    %c0_23 = arith.constant 0 : index
    %31 = vector.load %arg11[%30, %c0_23] : memref<64x128xf32, #tpu.memory_space<vmem>>, vector<8x128xf32>
    %c0_24 = arith.constant 0 : index
    %c0_25 = arith.constant 0 : index
    %32 = vector.load %arg6[%c0_24, %c0_25] : memref<128x128xf32, #tpu.memory_space<vmem>>, vector<128x128xf32>
    %cst_26 = arith.constant dense<0.000000e+00> : vector<8x128xf32>
    %33 = tpu.matmul %27, %32, %cst_26 {dimension_numbers = #tpu.dot_dimension_numbers<[1], [0], [0], [1], [0, 0, 1, 1], [], []>} : vector<8x128xf32>, vector<128x128xf32>, vector<8x128xf32> -> vector<8x128xf32>
    %c0_27 = arith.constant 0 : index
    %c0_28 = arith.constant 0 : index
    %34 = vector.load %arg4[%c0_27, %c0_28] : memref<128x128xf32, #tpu.memory_space<vmem>>, vector<128x128xf32>
    %cst_29 = arith.constant dense<0.000000e+00> : vector<8x128xf32>
    %35 = tpu.matmul %22, %34, %cst_29 {dimension_numbers = #tpu.dot_dimension_numbers<[1], [0], [0], [1], [0, 0, 1, 1], [], []>} : vector<8x128xf32>, vector<128x128xf32>, vector<8x128xf32> -> vector<8x128xf32>
    %36 = arith.addf %31, %35 : vector<8x128xf32>
    %37 = math.tanh %36 : vector<8x128xf32>
    %c0_30 = arith.constant 0 : index
    %c0_31 = arith.constant 0 : index
    %38 = vector.load %arg5[%c0_30, %c0_31] : memref<128x128xf32, #tpu.memory_space<vmem>>, vector<128x128xf32>
    %cst_32 = arith.constant dense<0.000000e+00> : vector<8x128xf32>
    %39 = tpu.matmul %37, %38, %cst_32 {dimension_numbers = #tpu.dot_dimension_numbers<[1], [0], [0], [1], [0, 0, 1, 1], [], []>} : vector<8x128xf32>, vector<128x128xf32>, vector<8x128xf32> -> vector<8x128xf32>
    %40 = arith.addf %39, %33 : vector<8x128xf32>
    %41 = arith.addf %40, %10 : vector<8x128xf32>
    %42 = math.tanh %41 : vector<8x128xf32>
    %c2_i32 = arith.constant 2 : i32
    %c8_i32_33 = arith.constant 8 : i32
    %43 = arith.muli %c2_i32, %c8_i32_33 : i32
    %44 = tpu.assume_multiple %43, 8 : i32
    %45 = arith.index_cast %44 : i32 to index
    %c0_34 = arith.constant 0 : index
    %46 = vector.load %arg11[%45, %c0_34] : memref<64x128xf32, #tpu.memory_space<vmem>>, vector<8x128xf32>
    %c0_35 = arith.constant 0 : index
    %c0_36 = arith.constant 0 : index
    %47 = vector.load %arg6[%c0_35, %c0_36] : memref<128x128xf32, #tpu.memory_space<vmem>>, vector<128x128xf32>
    %cst_37 = arith.constant dense<0.000000e+00> : vector<8x128xf32>
    %48 = tpu.matmul %42, %47, %cst_37 {dimension_numbers = #tpu.dot_dimension_numbers<[1], [0], [0], [1], [0, 0, 1, 1], [], []>} : vector<8x128xf32>, vector<128x128xf32>, vector<8x128xf32> -> vector<8x128xf32>
    %c0_38 = arith.constant 0 : index
    %c0_39 = arith.constant 0 : index
    %49 = vector.load %arg4[%c0_38, %c0_39] : memref<128x128xf32, #tpu.memory_space<vmem>>, vector<128x128xf32>
    %cst_40 = arith.constant dense<0.000000e+00> : vector<8x128xf32>
    %50 = tpu.matmul %37, %49, %cst_40 {dimension_numbers = #tpu.dot_dimension_numbers<[1], [0], [0], [1], [0, 0, 1, 1], [], []>} : vector<8x128xf32>, vector<128x128xf32>, vector<8x128xf32> -> vector<8x128xf32>
    %51 = arith.addf %46, %50 : vector<8x128xf32>
    %52 = math.tanh %51 : vector<8x128xf32>
    %c0_41 = arith.constant 0 : index
    %c0_42 = arith.constant 0 : index
    %53 = vector.load %arg5[%c0_41, %c0_42] : memref<128x128xf32, #tpu.memory_space<vmem>>, vector<128x128xf32>
    %cst_43 = arith.constant dense<0.000000e+00> : vector<8x128xf32>
    %54 = tpu.matmul %52, %53, %cst_43 {dimension_numbers = #tpu.dot_dimension_numbers<[1], [0], [0], [1], [0, 0, 1, 1], [], []>} : vector<8x128xf32>, vector<128x128xf32>, vector<8x128xf32> -> vector<8x128xf32>
    %55 = arith.addf %54, %48 : vector<8x128xf32>
    %56 = arith.addf %55, %10 : vector<8x128xf32>
    %57 = math.tanh %56 : vector<8x128xf32>
    %c3_i32 = arith.constant 3 : i32
    %c8_i32_44 = arith.constant 8 : i32
    %58 = arith.muli %c3_i32, %c8_i32_44 : i32
    %59 = tpu.assume_multiple %58, 8 : i32
    %60 = arith.index_cast %59 : i32 to index
    %c0_45 = arith.constant 0 : index
    %61 = vector.load %arg11[%60, %c0_45] : memref<64x128xf32, #tpu.memory_space<vmem>>, vector<8x128xf32>
    %c0_46 = arith.constant 0 : index
    %c0_47 = arith.constant 0 : index
    %62 = vector.load %arg6[%c0_46, %c0_47] : memref<128x128xf32, #tpu.memory_space<vmem>>, vector<128x128xf32>
    %cst_48 = arith.constant dense<0.000000e+00> : vector<8x128xf32>
    %63 = tpu.matmul %57, %62, %cst_48 {dimension_numbers = #tpu.dot_dimension_numbers<[1], [0], [0], [1], [0, 0, 1, 1], [], []>} : vector<8x128xf32>, vector<128x128xf32>, vector<8x128xf32> -> vector<8x128xf32>
    %c0_49 = arith.constant 0 : index
    %c0_50 = arith.constant 0 : index
    %64 = vector.load %arg4[%c0_49, %c0_50] : memref<128x128xf32, #tpu.memory_space<vmem>>, vector<128x128xf32>
    %cst_51 = arith.constant dense<0.000000e+00> : vector<8x128xf32>
    %65 = tpu.matmul %52, %64, %cst_51 {dimension_numbers = #tpu.dot_dimension_numbers<[1], [0], [0], [1], [0, 0, 1, 1], [], []>} : vector<8x128xf32>, vector<128x128xf32>, vector<8x128xf32> -> vector<8x128xf32>
    %66 = arith.addf %61, %65 : vector<8x128xf32>
    %67 = math.tanh %66 : vector<8x128xf32>
    %c0_52 = arith.constant 0 : index
    %c0_53 = arith.constant 0 : index
    %68 = vector.load %arg5[%c0_52, %c0_53] : memref<128x128xf32, #tpu.memory_space<vmem>>, vector<128x128xf32>
    %cst_54 = arith.constant dense<0.000000e+00> : vector<8x128xf32>
    %69 = tpu.matmul %67, %68, %cst_54 {dimension_numbers = #tpu.dot_dimension_numbers<[1], [0], [0], [1], [0, 0, 1, 1], [], []>} : vector<8x128xf32>, vector<128x128xf32>, vector<8x128xf32> -> vector<8x128xf32>
    %70 = arith.addf %69, %63 : vector<8x128xf32>
    %71 = arith.addf %70, %10 : vector<8x128xf32>
    %72 = math.tanh %71 : vector<8x128xf32>
    %c4_i32 = arith.constant 4 : i32
    %c8_i32_55 = arith.constant 8 : i32
    %73 = arith.muli %c4_i32, %c8_i32_55 : i32
    %74 = tpu.assume_multiple %73, 8 : i32
    %75 = arith.index_cast %74 : i32 to index
    %c0_56 = arith.constant 0 : index
    %76 = vector.load %arg11[%75, %c0_56] : memref<64x128xf32, #tpu.memory_space<vmem>>, vector<8x128xf32>
    %c0_57 = arith.constant 0 : index
    %c0_58 = arith.constant 0 : index
    %77 = vector.load %arg6[%c0_57, %c0_58] : memref<128x128xf32, #tpu.memory_space<vmem>>, vector<128x128xf32>
    %cst_59 = arith.constant dense<0.000000e+00> : vector<8x128xf32>
    %78 = tpu.matmul %72, %77, %cst_59 {dimension_numbers = #tpu.dot_dimension_numbers<[1], [0], [0], [1], [0, 0, 1, 1], [], []>} : vector<8x128xf32>, vector<128x128xf32>, vector<8x128xf32> -> vector<8x128xf32>
    %c0_60 = arith.constant 0 : index
    %c0_61 = arith.constant 0 : index
    %79 = vector.load %arg4[%c0_60, %c0_61] : memref<128x128xf32, #tpu.memory_space<vmem>>, vector<128x128xf32>
    %cst_62 = arith.constant dense<0.000000e+00> : vector<8x128xf32>
    %80 = tpu.matmul %67, %79, %cst_62 {dimension_numbers = #tpu.dot_dimension_numbers<[1], [0], [0], [1], [0, 0, 1, 1], [], []>} : vector<8x128xf32>, vector<128x128xf32>, vector<8x128xf32> -> vector<8x128xf32>
    %81 = arith.addf %76, %80 : vector<8x128xf32>
    %82 = math.tanh %81 : vector<8x128xf32>
    %c0_63 = arith.constant 0 : index
    %c0_64 = arith.constant 0 : index
    %83 = vector.load %arg5[%c0_63, %c0_64] : memref<128x128xf32, #tpu.memory_space<vmem>>, vector<128x128xf32>
    %cst_65 = arith.constant dense<0.000000e+00> : vector<8x128xf32>
    %84 = tpu.matmul %82, %83, %cst_65 {dimension_numbers = #tpu.dot_dimension_numbers<[1], [0], [0], [1], [0, 0, 1, 1], [], []>} : vector<8x128xf32>, vector<128x128xf32>, vector<8x128xf32> -> vector<8x128xf32>
    %85 = arith.addf %84, %78 : vector<8x128xf32>
    %86 = arith.addf %85, %10 : vector<8x128xf32>
    %87 = math.tanh %86 : vector<8x128xf32>
    %c5_i32 = arith.constant 5 : i32
    %c8_i32_66 = arith.constant 8 : i32
    %88 = arith.muli %c5_i32, %c8_i32_66 : i32
    %89 = tpu.assume_multiple %88, 8 : i32
    %90 = arith.index_cast %89 : i32 to index
    %c0_67 = arith.constant 0 : index
    %91 = vector.load %arg11[%90, %c0_67] : memref<64x128xf32, #tpu.memory_space<vmem>>, vector<8x128xf32>
    %c0_68 = arith.constant 0 : index
    %c0_69 = arith.constant 0 : index
    %92 = vector.load %arg6[%c0_68, %c0_69] : memref<128x128xf32, #tpu.memory_space<vmem>>, vector<128x128xf32>
    %cst_70 = arith.constant dense<0.000000e+00> : vector<8x128xf32>
    %93 = tpu.matmul %87, %92, %cst_70 {dimension_numbers = #tpu.dot_dimension_numbers<[1], [0], [0], [1], [0, 0, 1, 1], [], []>} : vector<8x128xf32>, vector<128x128xf32>, vector<8x128xf32> -> vector<8x128xf32>
    %c0_71 = arith.constant 0 : index
    %c0_72 = arith.constant 0 : index
    %94 = vector.load %arg4[%c0_71, %c0_72] : memref<128x128xf32, #tpu.memory_space<vmem>>, vector<128x128xf32>
    %cst_73 = arith.constant dense<0.000000e+00> : vector<8x128xf32>
    %95 = tpu.matmul %82, %94, %cst_73 {dimension_numbers = #tpu.dot_dimension_numbers<[1], [0], [0], [1], [0, 0, 1, 1], [], []>} : vector<8x128xf32>, vector<128x128xf32>, vector<8x128xf32> -> vector<8x128xf32>
    %96 = arith.addf %91, %95 : vector<8x128xf32>
    %97 = math.tanh %96 : vector<8x128xf32>
    %c0_74 = arith.constant 0 : index
    %c0_75 = arith.constant 0 : index
    %98 = vector.load %arg5[%c0_74, %c0_75] : memref<128x128xf32, #tpu.memory_space<vmem>>, vector<128x128xf32>
    %cst_76 = arith.constant dense<0.000000e+00> : vector<8x128xf32>
    %99 = tpu.matmul %97, %98, %cst_76 {dimension_numbers = #tpu.dot_dimension_numbers<[1], [0], [0], [1], [0, 0, 1, 1], [], []>} : vector<8x128xf32>, vector<128x128xf32>, vector<8x128xf32> -> vector<8x128xf32>
    %100 = arith.addf %99, %93 : vector<8x128xf32>
    %101 = arith.addf %100, %10 : vector<8x128xf32>
    %102 = math.tanh %101 : vector<8x128xf32>
    %c6_i32 = arith.constant 6 : i32
    %c8_i32_77 = arith.constant 8 : i32
    %103 = arith.muli %c6_i32, %c8_i32_77 : i32
    %104 = tpu.assume_multiple %103, 8 : i32
    %105 = arith.index_cast %104 : i32 to index
    %c0_78 = arith.constant 0 : index
    %106 = vector.load %arg11[%105, %c0_78] : memref<64x128xf32, #tpu.memory_space<vmem>>, vector<8x128xf32>
    %c0_79 = arith.constant 0 : index
    %c0_80 = arith.constant 0 : index
    %107 = vector.load %arg6[%c0_79, %c0_80] : memref<128x128xf32, #tpu.memory_space<vmem>>, vector<128x128xf32>
    %cst_81 = arith.constant dense<0.000000e+00> : vector<8x128xf32>
    %108 = tpu.matmul %102, %107, %cst_81 {dimension_numbers = #tpu.dot_dimension_numbers<[1], [0], [0], [1], [0, 0, 1, 1], [], []>} : vector<8x128xf32>, vector<128x128xf32>, vector<8x128xf32> -> vector<8x128xf32>
    %c0_82 = arith.constant 0 : index
    %c0_83 = arith.constant 0 : index
    %109 = vector.load %arg4[%c0_82, %c0_83] : memref<128x128xf32, #tpu.memory_space<vmem>>, vector<128x128xf32>
    %cst_84 = arith.constant dense<0.000000e+00> : vector<8x128xf32>
    %110 = tpu.matmul %97, %109, %cst_84 {dimension_numbers = #tpu.dot_dimension_numbers<[1], [0], [0], [1], [0, 0, 1, 1], [], []>} : vector<8x128xf32>, vector<128x128xf32>, vector<8x128xf32> -> vector<8x128xf32>
    %111 = arith.addf %106, %110 : vector<8x128xf32>
    %112 = math.tanh %111 : vector<8x128xf32>
    %c0_85 = arith.constant 0 : index
    %c0_86 = arith.constant 0 : index
    %113 = vector.load %arg5[%c0_85, %c0_86] : memref<128x128xf32, #tpu.memory_space<vmem>>, vector<128x128xf32>
    %cst_87 = arith.constant dense<0.000000e+00> : vector<8x128xf32>
    %114 = tpu.matmul %112, %113, %cst_87 {dimension_numbers = #tpu.dot_dimension_numbers<[1], [0], [0], [1], [0, 0, 1, 1], [], []>} : vector<8x128xf32>, vector<128x128xf32>, vector<8x128xf32> -> vector<8x128xf32>
    %115 = arith.addf %114, %108 : vector<8x128xf32>
    %116 = arith.addf %115, %10 : vector<8x128xf32>
    %117 = math.tanh %116 : vector<8x128xf32>
    %c7_i32 = arith.constant 7 : i32
    %c8_i32_88 = arith.constant 8 : i32
    %118 = arith.muli %c7_i32, %c8_i32_88 : i32
    %119 = tpu.assume_multiple %118, 8 : i32
    %120 = arith.index_cast %119 : i32 to index
    %c0_89 = arith.constant 0 : index
    %121 = vector.load %arg11[%120, %c0_89] : memref<64x128xf32, #tpu.memory_space<vmem>>, vector<8x128xf32>
    %c0_90 = arith.constant 0 : index
    %c0_91 = arith.constant 0 : index
    %122 = vector.load %arg6[%c0_90, %c0_91] : memref<128x128xf32, #tpu.memory_space<vmem>>, vector<128x128xf32>
    %cst_92 = arith.constant dense<0.000000e+00> : vector<8x128xf32>
    %123 = tpu.matmul %117, %122, %cst_92 {dimension_numbers = #tpu.dot_dimension_numbers<[1], [0], [0], [1], [0, 0, 1, 1], [], []>} : vector<8x128xf32>, vector<128x128xf32>, vector<8x128xf32> -> vector<8x128xf32>
    %c0_93 = arith.constant 0 : index
    %c0_94 = arith.constant 0 : index
    %124 = vector.load %arg4[%c0_93, %c0_94] : memref<128x128xf32, #tpu.memory_space<vmem>>, vector<128x128xf32>
    %cst_95 = arith.constant dense<0.000000e+00> : vector<8x128xf32>
    %125 = tpu.matmul %112, %124, %cst_95 {dimension_numbers = #tpu.dot_dimension_numbers<[1], [0], [0], [1], [0, 0, 1, 1], [], []>} : vector<8x128xf32>, vector<128x128xf32>, vector<8x128xf32> -> vector<8x128xf32>
    %126 = arith.addf %121, %125 : vector<8x128xf32>
    %127 = math.tanh %126 : vector<8x128xf32>
    %c0_96 = arith.constant 0 : index
    %c0_97 = arith.constant 0 : index
    %128 = vector.load %arg5[%c0_96, %c0_97] : memref<128x128xf32, #tpu.memory_space<vmem>>, vector<128x128xf32>
    %cst_98 = arith.constant dense<0.000000e+00> : vector<8x128xf32>
    %129 = tpu.matmul %127, %128, %cst_98 {dimension_numbers = #tpu.dot_dimension_numbers<[1], [0], [0], [1], [0, 0, 1, 1], [], []>} : vector<8x128xf32>, vector<128x128xf32>, vector<8x128xf32> -> vector<8x128xf32>
    %130 = arith.addf %129, %123 : vector<8x128xf32>
    %131 = arith.addf %130, %10 : vector<8x128xf32>
    %132 = math.tanh %131 : vector<8x128xf32>
    %c8_i32_99 = arith.constant 8 : i32
    %c0_100 = arith.constant 0 : index
    %c0_101 = arith.constant 0 : index
    %133 = vector.load %arg8[%c0_100, %c0_101] : memref<1x128xf32, #tpu.memory_space<vmem>>, vector<1x128xf32>
    %134 = vector.broadcast %133 : vector<1x128xf32> to vector<8x128xf32>
    %135 = arith.mulf %132, %134 : vector<8x128xf32>
    %cst_102 = arith.constant dense<0.000000e+00> : vector<8xf32>
    %136 = vector.multi_reduction <add>, %135, %cst_102 [1] : vector<8x128xf32> to vector<8xf32>
    %137 = vector.shape_cast %136 : vector<8xf32> to vector<8x1xf32>
    %c0_103 = arith.constant 0 : index
    %138 = memref.load %arg9[%c0_103] : memref<1xf32, #tpu.memory_space<smem>>
    %139 = vector.broadcast %138 : f32 to vector<8x1xf32>
    %140 = arith.addf %137, %139 : vector<8x1xf32>
    %141 = vector.shape_cast %140 : vector<8x1xf32> to vector<8x1xf32>
    %142 = vector.broadcast %141 : vector<8x1xf32> to vector<8x128xf32>
    %c0_104 = arith.constant 0 : index
    %c0_105 = arith.constant 0 : index
    %143 = vector.load %arg10[%c0_104, %c0_105] : memref<8x128xf32, #tpu.memory_space<vmem>>, vector<8x128xf32>
    tpu.vector_store %arg10[%c0_104, %c0_105], %142 {strides = array<i32>} : memref<8x128xf32, #tpu.memory_space<vmem>>, vector<8x128xf32>,
    return
  }
  func.func @transform_0(%arg0: i32) -> (i32, i32, i32) {
    %c0_i32 = arith.constant 0 : i32
    %c0_i32_0 = arith.constant 0 : i32
    %c0_i32_1 = arith.constant 0 : i32
    return %c0_i32, %arg0, %c0_i32_0 : i32, i32, i32
  }
  func.func @transform_1(%arg0: i32) -> (i32, i32) {
    %c0_i32 = arith.constant 0 : i32
    %c0_i32_0 = arith.constant 0 : i32
    %c0_i32_1 = arith.constant 0 : i32
    return %c0_i32, %c0_i32_0 : i32, i32
  }
  func.func @transform_2(%arg0: i32) -> (i32, i32) {
    %c0_i32 = arith.constant 0 : i32
    %c0_i32_0 = arith.constant 0 : i32
    %c0_i32_1 = arith.constant 0 : i32
    return %c0_i32, %c0_i32_0 : i32, i32
  }
  func.func @transform_3(%arg0: i32) -> (i32, i32) {
    %c0_i32 = arith.constant 0 : i32
    %c0_i32_0 = arith.constant 0 : i32
    %c0_i32_1 = arith.constant 0 : i32
    return %c0_i32, %c0_i32_0 : i32, i32
  }
  func.func @transform_4(%arg0: i32) -> (i32, i32) {
    %c0_i32 = arith.constant 0 : i32
    %c0_i32_0 = arith.constant 0 : i32
    %c0_i32_1 = arith.constant 0 : i32
    return %c0_i32, %c0_i32_0 : i32, i32
  }
  func.func @transform_5(%arg0: i32) -> (i32, i32) {
    %c0_i32 = arith.constant 0 : i32
    %c0_i32_0 = arith.constant 0 : i32
    %c0_i32_1 = arith.constant 0 : i32
    return %c0_i32, %c0_i32_0 : i32, i32
  }
  func.func @transform_6(%arg0: i32) -> (i32, i32) {
    %c0_i32 = arith.constant 0 : i32
    %c0_i32_0 = arith.constant 0 : i32
    %c0_i32_1 = arith.constant 0 : i32
    return %c0_i32, %c0_i32_0 : i32, i32
  }
  func.func @transform_7(%arg0: i32) -> (i32, i32) {
    %c0_i32 = arith.constant 0 : i32
    %c0_i32_0 = arith.constant 0 : i32
    %c0_i32_1 = arith.constant 0 : i32
    return %c0_i32, %c0_i32_0 : i32, i32
  }
  func.func @transform_8(%arg0: i32) -> i32 {
    %c0_i32 = arith.constant 0 : i32
    %c0_i32_0 = arith.constant 0 : i32
    return %c0_i32 : i32
  }
  func.func @transform_9(%arg0: i32) -> (i32, i32) {
    %c0_i32 = arith.constant 0 : i32
    %c0_i32_0 = arith.constant 0 : i32
    return %arg0, %c0_i32 : i32, i32
  }
}

</mosaic_0001>

<llo_original>
// kernel: rnn_model_forward.1
$region0: #{rnn_model_forward.1}
  #allocation0 [shape = 'u32[]', space=smem, size = 0x4, offset = 0x4, fixed_abs, tag = 'smem constant byte address 0x4 - core index']
  #allocation1 [shape = 'u32[72,128]{1,0:T(1,128)}', space=vmem, size = 0x9000, scoped, tag = 'internal scratch']
  #allocation2 [shape = 'f32[64,128]{1,0:T(8,128)}', space=vmem, size = 0x8000, scoped, tag = 'scratch operand']
  #allocation3 [shape = 'f32[1]{0:T(128)S(6)}', space=smem, size = 0x200, scoped, tag = 'scoped memory for rnn_model_forward.1']
  %s0 = inlined_call_operand.vmem [shape: f32[8,8,16], index: 0, kind: input, shape index: {}]
  %s1 = inlined_call_operand.vmem [shape: f32[16,128], index: 1, kind: input, shape index: {}]
  %s2 = inlined_call_operand.vmem [shape: f32[1,128], index: 2, kind: input, shape index: {}]
  %s3 = inlined_call_operand.vmem [shape: f32[128,128], index: 3, kind: input, shape index: {}]
  %s4 = inlined_call_operand.vmem [shape: f32[128,128], index: 4, kind: input, shape index: {}]
  %s5 = inlined_call_operand.vmem [shape: f32[128,128], index: 5, kind: input, shape index: {}]
  %s6 = inlined_call_operand.vmem [shape: f32[1,128], index: 6, kind: input, shape index: {}]
  %s7 = inlined_call_operand.vmem [shape: f32[1,128], index: 7, kind: input, shape index: {}]
  %s8 = inlined_call_operand.<no memory space> [shape: f32[1], index: 8, kind: input, shape index: {}]
  %s9 = inlined_call_operand.vmem [shape: f32[8,128], index: 9, kind: output, shape index: {}]
  %s10 = sld [smem:[#allocation0]]
  $region46: #{rnn_model_forward.1} parent=0
    _
  %s12 = ssub.s32 1, %s10
  %s13 = scalar_select 0, %s12, %s10
  %14 = sst [smem:[#allocation3]] %s8
  // Predicated region
  $region2: #{rnn_model_forward.1} parent=0 // pred_check
    _
  $region3: #{rnn_model_forward.1} parent=0 // pred_check_branch
    %16 = sbr.rel (0) target = $region5
  $region4: #{rnn_model_forward.1} parent=0 // pred_region
    _
  $region5: #{rnn_model_forward.1} parent=0 // pred_fallthru
    _
  // Predicated region
  $region6: #{rnn_model_forward.1} parent=0 // pred_check
    _
  $region7: #{rnn_model_forward.1} parent=0 // pred_check_branch
    %18 = sbr.rel (0) target = $region9
  $region8: #{rnn_model_forward.1} parent=0 // pred_region
    _
  $region9: #{rnn_model_forward.1} parent=0 // pred_fallthru
    _
  // Predicated region
  $region10: #{rnn_model_forward.1} parent=0 // pred_check
    _
  $region11: #{rnn_model_forward.1} parent=0 // pred_check_branch
    %20 = sbr.rel (0) target = $region13
  $region12: #{rnn_model_forward.1} parent=0 // pred_region
    _
  $region13: #{rnn_model_forward.1} parent=0 // pred_fallthru
    _
  // Predicated region
  $region14: #{rnn_model_forward.1} parent=0 // pred_check
    _
  $region15: #{rnn_model_forward.1} parent=0 // pred_check_branch
    %22 = sbr.rel (0) target = $region17
  $region16: #{rnn_model_forward.1} parent=0 // pred_region
    _
  $region17: #{rnn_model_forward.1} parent=0 // pred_fallthru
    _
  // Predicated region
  $region18: #{rnn_model_forward.1} parent=0 // pred_check
    _
  $region19: #{rnn_model_forward.1} parent=0 // pred_check_branch
    %24 = sbr.rel (0) target = $region21
  $region20: #{rnn_model_forward.1} parent=0 // pred_region
    _
  $region21: #{rnn_model_forward.1} parent=0 // pred_fallthru
    _
  // Predicated region
  $region22: #{rnn_model_forward.1} parent=0 // pred_check
    _
  $region23: #{rnn_model_forward.1} parent=0 // pred_check_branch
    %26 = sbr.rel (0) target = $region25
  $region24: #{rnn_model_forward.1} parent=0 // pred_region
    _
  $region25: #{rnn_model_forward.1} parent=0 // pred_fallthru
    _
  // Predicated region
  $region26: #{rnn_model_forward.1} parent=0 // pred_check
    _
  $region27: #{rnn_model_forward.1} parent=0 // pred_check_branch
    %28 = sbr.rel (0) target = $region29
  $region28: #{rnn_model_forward.1} parent=0 // pred_region
    _
  $region29: #{rnn_model_forward.1} parent=0 // pred_fallthru
    _
  // Predicated region
  $region30: #{rnn_model_forward.1} parent=0 // pred_check
    _
  $region31: #{rnn_model_forward.1} parent=0 // pred_check_branch
    %30 = sbr.rel (0) target = $region33
  $region32: #{rnn_model_forward.1} parent=0 // pred_region
    _
  $region33: #{rnn_model_forward.1} parent=0 // pred_fallthru
    _
  // Predicated region
  $region34: #{rnn_model_forward.1} parent=0 // pred_check
    _
  $region35: #{rnn_model_forward.1} parent=0 // pred_check_branch
    %32 = sbr.rel (0) target = $region37
  $region36: #{rnn_model_forward.1} parent=0 // pred_region
    _
  $region37: #{rnn_model_forward.1} parent=0 // pred_fallthru
    _
  %v33 = vld [vmem:[%s0] sm:$0xff]
  %v34 = vld [vmem:[%s0 + $0x8] sm:$0xff]
  %v35 = vld [vmem:[%s0 + $0x10] sm:$0xff]
  %v36 = vld [vmem:[%s0 + $0x18] sm:$0xff]
  %v37 = vld [vmem:[%s0 + $0x20] sm:$0xff]
  %v38 = vld [vmem:[%s0 + $0x28] sm:$0xff]
  %v39 = vld [vmem:[%s0 + $0x30] sm:$0xff]
  %v40 = vld [vmem:[%s0 + $0x38] sm:$0xff]
  %v41 = vld [vmem:[%s1] sm:$0xff]
  %v42 = vld [vmem:[%s1 + $0x8] sm:$0xff]
  %v43 = vld [vmem:[%s2] sm:$0x1]
  %v45 = vperm.slane %v43, 0
  %vm47 = vcmask 130048
  %v49 = vsel %vm47, %v33, 0
  %v52 = vsel %vm47, %v34, 0
  %v55 = vsel %vm47, %v35, 0
  %v58 = vsel %vm47, %v36, 0
  %v61 = vsel %vm47, %v37, 0
  %v64 = vsel %vm47, %v38, 0
  %v67 = vsel %vm47, %v39, 0
  %v70 = vsel %vm47, %v40, 0
  %72 = vmatpush.msra.mxu0 0.0
  %73 = vmatpush.msra.mxu0 0.0
  %74 = vmatpush.msra.mxu0 0.0
  %75 = vmatpush.msra.mxu0 0.0
  %76 = vmatpush.msra.mxu0 0.0
  %77 = vmatpush.msra.mxu0 0.0
  %78 = vmatpush.msra.mxu0 0.0
  %79 = vmatpush.msra.mxu0 0.0
  %80 = vmatpush.msra.mxu0 0.0
  %81 = vmatpush.msra.mxu0 0.0
  %82 = vmatpush.msra.mxu0 0.0
  %83 = vmatpush.msra.mxu0 0.0
  %84 = vmatpush.msra.mxu0 0.0
  %85 = vmatpush.msra.mxu0 0.0
  %86 = vmatpush.msra.mxu0 %v42
  %87 = vmatpush.msra.mxu0 %v41
  %88 = vmatmul.f32.gmra.mxu0 %v49
  %v89 = vpop.f32.mrf.mxu0
  %v90 = vadd.f32 %v45, %v89
  %91 = vmatmul.f32.gmra.mxu0 %v52
  %v92 = vpop.f32.mrf.mxu0
  %v93 = vadd.f32 %v45, %v92
  %94 = vmatmul.f32.gmra.mxu0 %v55
  %v95 = vpop.f32.mrf.mxu0
  %v96 = vadd.f32 %v45, %v95
  %97 = vmatmul.f32.gmra.mxu0 %v58
  %v98 = vpop.f32.mrf.mxu0
  %v99 = vadd.f32 %v45, %v98
  %100 = vmatmul.f32.gmra.mxu0 %v61
  %v101 = vpop.f32.mrf.mxu0
  %v102 = vadd.f32 %v45, %v101
  %103 = vmatmul.f32.gmra.mxu0 %v64
  %v104 = vpop.f32.mrf.mxu0
  %v105 = vadd.f32 %v45, %v104
  %106 = vmatmul.f32.gmra.mxu0 %v67
  %v107 = vpop.f32.mrf.mxu0
  %v108 = vadd.f32 %v45, %v107
  %109 = vmatmul.f32.gmra.mxu0 %v70
  %v110 = vpop.f32.mrf.mxu0
  %v111 = vadd.f32 %v45, %v110
  %112 = vdwg.mxu0
  %113 = vst [vmem:[#allocation2] sm:$0xff] %v90
  %114 = vst [vmem:[#allocation2 + $0x8] sm:$0xff] %v93
  %115 = vst [vmem:[#allocation2 + $0x10] sm:$0xff] %v96
  %116 = vst [vmem:[#allocation2 + $0x18] sm:$0xff] %v99
  %117 = vst [vmem:[#allocation2 + $0x20] sm:$0xff] %v102
  %118 = vst [vmem:[#allocation2 + $0x28] sm:$0xff] %v105
  %119 = vst [vmem:[#allocation2 + $0x30] sm:$0xff] %v108
  %120 = vst [vmem:[#allocation2 + $0x38] sm:$0xff] %v111
  %v121 = vld [vmem:[%s6] sm:$0x1]
  %v123 = vperm.slane %v121, 0
  %v125 = vld [vmem:[#allocation2] sm:$0xff]
  %v126 = vld [vmem:[%s5] sm:$0xff]
  %v127 = vld [vmem:[%s5 + $0x8] sm:$0xff]
  %v128 = vld [vmem:[%s5 + $0x10] sm:$0xff]
  %v129 = vld [vmem:[%s5 + $0x18] sm:$0xff]
  %v130 = vld [vmem:[%s5 + $0x20] sm:$0xff]
  %v131 = vld [vmem:[%s5 + $0x28] sm:$0xff]
  %v132 = vld [vmem:[%s5 + $0x30] sm:$0xff]
  %v133 = vld [vmem:[%s5 + $0x38] sm:$0xff]
  %v134 = vld [vmem:[%s5 + $0x40] sm:$0xff]
  %v135 = vld [vmem:[%s5 + $0x48] sm:$0xff]
  %v136 = vld [vmem:[%s5 + $0x50] sm:$0xff]
  %v137 = vld [vmem:[%s5 + $0x58] sm:$0xff]
  %v138 = vld [vmem:[%s5 + $0x60] sm:$0xff]
  %v139 = vld [vmem:[%s5 + $0x68] sm:$0xff]
  %v140 = vld [vmem:[%s5 + $0x70] sm:$0xff]
  %v141 = vld [vmem:[%s5 + $0x78] sm:$0xff]
  %142 = vmatpush.msra.mxu0 %v141
  %143 = vmatpush.msra.mxu0 %v140
  %144 = vmatpush.msra.mxu0 %v139
  %145 = vmatpush.msra.mxu0 %v138
  %146 = vmatpush.msra.mxu0 %v137
  %147 = vmatpush.msra.mxu0 %v136
  %148 = vmatpush.msra.mxu0 %v135
  %149 = vmatpush.msra.mxu0 %v134
  %150 = vmatpush.msra.mxu0 %v133
  %151 = vmatpush.msra.mxu0 %v132
  %152 = vmatpush.msra.mxu0 %v131
  %153 = vmatpush.msra.mxu0 %v130
  %154 = vmatpush.msra.mxu0 %v129
  %155 = vmatpush.msra.mxu0 %v128
  %156 = vmatpush.msra.mxu0 %v127
  %157 = vmatpush.msra.mxu0 %v126
  %158 = vmatmul.f32.gmra.mxu0 0.0
  %v159 = vpop.f32.mrf.mxu0
  %v160 = vadd.f32 0.0, %v159
  %161 = vdwg.mxu0
  %v162 = vld [vmem:[%s3] sm:$0xff]
  %v163 = vld [vmem:[%s3 + $0x8] sm:$0xff]
  %v164 = vld [vmem:[%s3 + $0x10] sm:$0xff]
  %v165 = vld [vmem:[%s3 + $0x18] sm:$0xff]
  %v166 = vld [vmem:[%s3 + $0x20] sm:$0xff]
  %v167 = vld [vmem:[%s3 + $0x28] sm:$0xff]
  %v168 = vld [vmem:[%s3 + $0x30] sm:$0xff]
  %v169 = vld [vmem:[%s3 + $0x38] sm:$0xff]
  %v170 = vld [vmem:[%s3 + $0x40] sm:$0xff]
  %v171 = vld [vmem:[%s3 + $0x48] sm:$0xff]
  %v172 = vld [vmem:[%s3 + $0x50] sm:$0xff]
  %v173 = vld [vmem:[%s3 + $0x58] sm:$0xff]
  %v174 = vld [vmem:[%s3 + $0x60] sm:$0xff]
  %v175 = vld [vmem:[%s3 + $0x68] sm:$0xff]
  %v176 = vld [vmem:[%s3 + $0x70] sm:$0xff]
  %v177 = vld [vmem:[%s3 + $0x78] sm:$0xff]
  %178 = vmatpush.msra.mxu0 %v177
  %179 = vmatpush.msra.mxu0 %v176
  %180 = vmatpush.msra.mxu0 %v175
  %181 = vmatpush.msra.mxu0 %v174
  %182 = vmatpush.msra.mxu0 %v173
  %183 = vmatpush.msra.mxu0 %v172
  %184 = vmatpush.msra.mxu0 %v171
  %185 = vmatpush.msra.mxu0 %v170
  %186 = vmatpush.msra.mxu0 %v169
  %187 = vmatpush.msra.mxu0 %v168
  %188 = vmatpush.msra.mxu0 %v167
  %189 = vmatpush.msra.mxu0 %v166
  %190 = vmatpush.msra.mxu0 %v165
  %191 = vmatpush.msra.mxu0 %v164
  %192 = vmatpush.msra.mxu0 %v163
  %193 = vmatpush.msra.mxu0 %v162
  %194 = vmatmul.f32.gmra.mxu0 0.0
  %v195 = vpop.f32.mrf.mxu0
  %v196 = vadd.f32 0.0, %v195
  %197 = vdwg.mxu0
  %v198 = vadd.f32 %v125, %v196
  %v199 = vtanh.pop %v198
  %v200 = vld [vmem:[%s4] sm:$0xff]
  %v201 = vld [vmem:[%s4 + $0x8] sm:$0xff]
  %v202 = vld [vmem:[%s4 + $0x10] sm:$0xff]
  %v203 = vld [vmem:[%s4 + $0x18] sm:$0xff]
  %v204 = vld [vmem:[%s4 + $0x20] sm:$0xff]
  %v205 = vld [vmem:[%s4 + $0x28] sm:$0xff]
  %v206 = vld [vmem:[%s4 + $0x30] sm:$0xff]
  %v207 = vld [vmem:[%s4 + $0x38] sm:$0xff]
  %v208 = vld [vmem:[%s4 + $0x40] sm:$0xff]
  %v209 = vld [vmem:[%s4 + $0x48] sm:$0xff]
  %v210 = vld [vmem:[%s4 + $0x50] sm:$0xff]
  %v211 = vld [vmem:[%s4 + $0x58] sm:$0xff]
  %v212 = vld [vmem:[%s4 + $0x60] sm:$0xff]
  %v213 = vld [vmem:[%s4 + $0x68] sm:$0xff]
  %v214 = vld [vmem:[%s4 + $0x70] sm:$0xff]
  %v215 = vld [vmem:[%s4 + $0x78] sm:$0xff]
  %216 = vmatpush.msra.mxu0 %v215
  %217 = vmatpush.msra.mxu0 %v214
  %218 = vmatpush.msra.mxu0 %v213
  %219 = vmatpush.msra.mxu0 %v212
  %220 = vmatpush.msra.mxu0 %v211
  %221 = vmatpush.msra.mxu0 %v210
  %222 = vmatpush.msra.mxu0 %v209
  %223 = vmatpush.msra.mxu0 %v208
  %224 = vmatpush.msra.mxu0 %v207
  %225 = vmatpush.msra.mxu0 %v206
  %226 = vmatpush.msra.mxu0 %v205
  %227 = vmatpush.msra.mxu0 %v204
  %228 = vmatpush.msra.mxu0 %v203
  %229 = vmatpush.msra.mxu0 %v202
  %230 = vmatpush.msra.mxu0 %v201
  %231 = vmatpush.msra.mxu0 %v200
  %232 = vmatmul.f32.gmra.mxu0 %v199
  %v233 = vpop.f32.mrf.mxu0
  %v234 = vadd.f32 %v160, %v233
  %235 = vdwg.mxu0
  %v236 = vadd.f32 %v234, %v123
  %v237 = vtanh.pop %v236
  %s238 = scalar_lea.vmem [#allocation2], 8
  %v239 = vld [vmem:[%s238] sm:$0xff]
  %240 = vmatpush.msra.mxu0 %v141
  %241 = vmatpush.msra.mxu0 %v140
  %242 = vmatpush.msra.mxu0 %v139
  %243 = vmatpush.msra.mxu0 %v138
  %244 = vmatpush.msra.mxu0 %v137
  %245 = vmatpush.msra.mxu0 %v136
  %246 = vmatpush.msra.mxu0 %v135
  %247 = vmatpush.msra.mxu0 %v134
  %248 = vmatpush.msra.mxu0 %v133
  %249 = vmatpush.msra.mxu0 %v132
  %250 = vmatpush.msra.mxu0 %v131
  %251 = vmatpush.msra.mxu0 %v130
  %252 = vmatpush.msra.mxu0 %v129
  %253 = vmatpush.msra.mxu0 %v128
  %254 = vmatpush.msra.mxu0 %v127
  %255 = vmatpush.msra.mxu0 %v126
  %256 = vmatmul.f32.gmra.mxu0 %v237
  %v257 = vpop.f32.mrf.mxu0
  %v258 = vadd.f32 0.0, %v257
  %259 = vdwg.mxu0
  %260 = vmatpush.msra.mxu0 %v177
  %261 = vmatpush.msra.mxu0 %v176
  %262 = vmatpush.msra.mxu0 %v175
  %263 = vmatpush.msra.mxu0 %v174
  %264 = vmatpush.msra.mxu0 %v173
  %265 = vmatpush.msra.mxu0 %v172
  %266 = vmatpush.msra.mxu0 %v171
  %267 = vmatpush.msra.mxu0 %v170
  %268 = vmatpush.msra.mxu0 %v169
  %269 = vmatpush.msra.mxu0 %v168
  %270 = vmatpush.msra.mxu0 %v167
  %271 = vmatpush.msra.mxu0 %v166
  %272 = vmatpush.msra.mxu0 %v165
  %273 = vmatpush.msra.mxu0 %v164
  %274 = vmatpush.msra.mxu0 %v163
  %275 = vmatpush.msra.mxu0 %v162
  %276 = vmatmul.f32.gmra.mxu0 %v199
  %v277 = vpop.f32.mrf.mxu0
  %v278 = vadd.f32 0.0, %v277
  %279 = vdwg.mxu0
  %v280 = vadd.f32 %v239, %v278
  %v281 = vtanh.pop %v280
  %282 = vmatpush.msra.mxu0 %v215
  %283 = vmatpush.msra.mxu0 %v214
  %284 = vmatpush.msra.mxu0 %v213
  %285 = vmatpush.msra.mxu0 %v212
  %286 = vmatpush.msra.mxu0 %v211
  %287 = vmatpush.msra.mxu0 %v210
  %288 = vmatpush.msra.mxu0 %v209
  %289 = vmatpush.msra.mxu0 %v208
  %290 = vmatpush.msra.mxu0 %v207
  %291 = vmatpush.msra.mxu0 %v206
  %292 = vmatpush.msra.mxu0 %v205
  %293 = vmatpush.msra.mxu0 %v204
  %294 = vmatpush.msra.mxu0 %v203
  %295 = vmatpush.msra.mxu0 %v202
  %296 = vmatpush.msra.mxu0 %v201
  %297 = vmatpush.msra.mxu0 %v200
  %298 = vmatmul.f32.gmra.mxu0 %v281
  %v299 = vpop.f32.mrf.mxu0
  %v300 = vadd.f32 %v258, %v299
  %301 = vdwg.mxu0
  %v302 = vadd.f32 %v300, %v123
  %v303 = vtanh.pop %v302
  %s304 = scalar_lea.vmem [#allocation2], 16
  %v305 = vld [vmem:[%s304] sm:$0xff]
  %306 = vmatpush.msra.mxu0 %v141
  %307 = vmatpush.msra.mxu0 %v140
  %308 = vmatpush.msra.mxu0 %v139
  %309 = vmatpush.msra.mxu0 %v138
  %310 = vmatpush.msra.mxu0 %v137
  %311 = vmatpush.msra.mxu0 %v136
  %312 = vmatpush.msra.mxu0 %v135
  %313 = vmatpush.msra.mxu0 %v134
  %314 = vmatpush.msra.mxu0 %v133
  %315 = vmatpush.msra.mxu0 %v132
  %316 = vmatpush.msra.mxu0 %v131
  %317 = vmatpush.msra.mxu0 %v130
  %318 = vmatpush.msra.mxu0 %v129
  %319 = vmatpush.msra.mxu0 %v128
  %320 = vmatpush.msra.mxu0 %v127
  %321 = vmatpush.msra.mxu0 %v126
  %322 = vmatmul.f32.gmra.mxu0 %v303
  %v323 = vpop.f32.mrf.mxu0
  %v324 = vadd.f32 0.0, %v323
  %325 = vdwg.mxu0
  %326 = vmatpush.msra.mxu0 %v177
  %327 = vmatpush.msra.mxu0 %v176
  %328 = vmatpush.msra.mxu0 %v175
  %329 = vmatpush.msra.mxu0 %v174
  %330 = vmatpush.msra.mxu0 %v173
  %331 = vmatpush.msra.mxu0 %v172
  %332 = vmatpush.msra.mxu0 %v171
  %333 = vmatpush.msra.mxu0 %v170
  %334 = vmatpush.msra.mxu0 %v169
  %335 = vmatpush.msra.mxu0 %v168
  %336 = vmatpush.msra.mxu0 %v167
  %337 = vmatpush.msra.mxu0 %v166
  %338 = vmatpush.msra.mxu0 %v165
  %339 = vmatpush.msra.mxu0 %v164
  %340 = vmatpush.msra.mxu0 %v163
  %341 = vmatpush.msra.mxu0 %v162
  %342 = vmatmul.f32.gmra.mxu0 %v281
  %v343 = vpop.f32.mrf.mxu0
  %v344 = vadd.f32 0.0, %v343
  %345 = vdwg.mxu0
  %v346 = vadd.f32 %v305, %v344
  %v347 = vtanh.pop %v346
  %348 = vmatpush.msra.mxu0 %v215
  %349 = vmatpush.msra.mxu0 %v214
  %350 = vmatpush.msra.mxu0 %v213
  %351 = vmatpush.msra.mxu0 %v212
  %352 = vmatpush.msra.mxu0 %v211
  %353 = vmatpush.msra.mxu0 %v210
  %354 = vmatpush.msra.mxu0 %v209
  %355 = vmatpush.msra.mxu0 %v208
  %356 = vmatpush.msra.mxu0 %v207
  %357 = vmatpush.msra.mxu0 %v206
  %358 = vmatpush.msra.mxu0 %v205
  %359 = vmatpush.msra.mxu0 %v204
  %360 = vmatpush.msra.mxu0 %v203
  %361 = vmatpush.msra.mxu0 %v202
  %362 = vmatpush.msra.mxu0 %v201
  %363 = vmatpush.msra.mxu0 %v200
  %364 = vmatmul.f32.gmra.mxu0 %v347
  %v365 = vpop.f32.mrf.mxu0
  %v366 = vadd.f32 %v324, %v365
  %367 = vdwg.mxu0
  %v368 = vadd.f32 %v366, %v123
  %v369 = vtanh.pop %v368
  %s370 = scalar_lea.vmem [#allocation2], 24
  %v371 = vld [vmem:[%s370] sm:$0xff]
  %372 = vmatpush.msra.mxu0 %v141
  %373 = vmatpush.msra.mxu0 %v140
  %374 = vmatpush.msra.mxu0 %v139
  %375 = vmatpush.msra.mxu0 %v138
  %376 = vmatpush.msra.mxu0 %v137
  %377 = vmatpush.msra.mxu0 %v136
  %378 = vmatpush.msra.mxu0 %v135
  %379 = vmatpush.msra.mxu0 %v134
  %380 = vmatpush.msra.mxu0 %v133
  %381 = vmatpush.msra.mxu0 %v132
  %382 = vmatpush.msra.mxu0 %v131
  %383 = vmatpush.msra.mxu0 %v130
  %384 = vmatpush.msra.mxu0 %v129
  %385 = vmatpush.msra.mxu0 %v128
  %386 = vmatpush.msra.mxu0 %v127
  %387 = vmatpush.msra.mxu0 %v126
  %388 = vmatmul.f32.gmra.mxu0 %v369
  %v389 = vpop.f32.mrf.mxu0
  %v390 = vadd.f32 0.0, %v389
  %391 = vdwg.mxu0
  %392 = vmatpush.msra.mxu0 %v177
  %393 = vmatpush.msra.mxu0 %v176
  %394 = vmatpush.msra.mxu0 %v175
  %395 = vmatpush.msra.mxu0 %v174
  %396 = vmatpush.msra.mxu0 %v173
  %397 = vmatpush.msra.mxu0 %v172
  %398 = vmatpush.msra.mxu0 %v171
  %399 = vmatpush.msra.mxu0 %v170
  %400 = vmatpush.msra.mxu0 %v169
  %401 = vmatpush.msra.mxu0 %v168
  %402 = vmatpush.msra.mxu0 %v167
  %403 = vmatpush.msra.mxu0 %v166
  %404 = vmatpush.msra.mxu0 %v165
  %405 = vmatpush.msra.mxu0 %v164
  %406 = vmatpush.msra.mxu0 %v163
  %407 = vmatpush.msra.mxu0 %v162
  %408 = vmatmul.f32.gmra.mxu0 %v347
  %v409 = vpop.f32.mrf.mxu0
  %v410 = vadd.f32 0.0, %v409
  %411 = vdwg.mxu0
  %v412 = vadd.f32 %v371, %v410
  %v413 = vtanh.pop %v412
  %414 = vmatpush.msra.mxu0 %v215
  %415 = vmatpush.msra.mxu0 %v214
  %416 = vmatpush.msra.mxu0 %v213
  %417 = vmatpush.msra.mxu0 %v212
  %418 = vmatpush.msra.mxu0 %v211
  %419 = vmatpush.msra.mxu0 %v210
  %420 = vmatpush.msra.mxu0 %v209
  %421 = vmatpush.msra.mxu0 %v208
  %422 = vmatpush.msra.mxu0 %v207
  %423 = vmatpush.msra.mxu0 %v206
  %424 = vmatpush.msra.mxu0 %v205
  %425 = vmatpush.msra.mxu0 %v204
  %426 = vmatpush.msra.mxu0 %v203
  %427 = vmatpush.msra.mxu0 %v202
  %428 = vmatpush.msra.mxu0 %v201
  %429 = vmatpush.msra.mxu0 %v200
  %430 = vmatmul.f32.gmra.mxu0 %v413
  %v431 = vpop.f32.mrf.mxu0
  %v432 = vadd.f32 %v390, %v431
  %433 = vdwg.mxu0
  %v434 = vadd.f32 %v432, %v123
  %v435 = vtanh.pop %v434
  %s436 = scalar_lea.vmem [#allocation2], 32
  %v437 = vld [vmem:[%s436] sm:$0xff]
  %438 = vmatpush.msra.mxu0 %v141
  %439 = vmatpush.msra.mxu0 %v140
  %440 = vmatpush.msra.mxu0 %v139
  %441 = vmatpush.msra.mxu0 %v138
  %442 = vmatpush.msra.mxu0 %v137
  %443 = vmatpush.msra.mxu0 %v136
  %444 = vmatpush.msra.mxu0 %v135
  %445 = vmatpush.msra.mxu0 %v134
  %446 = vmatpush.msra.mxu0 %v133
  %447 = vmatpush.msra.mxu0 %v132
  %448 = vmatpush.msra.mxu0 %v131
  %449 = vmatpush.msra.mxu0 %v130
  %450 = vmatpush.msra.mxu0 %v129
  %451 = vmatpush.msra.mxu0 %v128
  %452 = vmatpush.msra.mxu0 %v127
  %453 = vmatpush.msra.mxu0 %v126
  %454 = vmatmul.f32.gmra.mxu0 %v435
  %v455 = vpop.f32.mrf.mxu0
  %v456 = vadd.f32 0.0, %v455
  %457 = vdwg.mxu0
  %458 = vmatpush.msra.mxu0 %v177
  %459 = vmatpush.msra.mxu0 %v176
  %460 = vmatpush.msra.mxu0 %v175
  %461 = vmatpush.msra.mxu0 %v174
  %462 = vmatpush.msra.mxu0 %v173
  %463 = vmatpush.msra.mxu0 %v172
  %464 = vmatpush.msra.mxu0 %v171
  %465 = vmatpush.msra.mxu0 %v170
  %466 = vmatpush.msra.mxu0 %v169
  %467 = vmatpush.msra.mxu0 %v168
  %468 = vmatpush.msra.mxu0 %v167
  %469 = vmatpush.msra.mxu0 %v166
  %470 = vmatpush.msra.mxu0 %v165
  %471 = vmatpush.msra.mxu0 %v164
  %472 = vmatpush.msra.mxu0 %v163
  %473 = vmatpush.msra.mxu0 %v162
  %474 = vmatmul.f32.gmra.mxu0 %v413
  %v475 = vpop.f32.mrf.mxu0
  %v476 = vadd.f32 0.0, %v475
  %477 = vdwg.mxu0
  %v478 = vadd.f32 %v437, %v476
  %v479 = vtanh.pop %v478
  %480 = vmatpush.msra.mxu0 %v215
  %481 = vmatpush.msra.mxu0 %v214
  %482 = vmatpush.msra.mxu0 %v213
  %483 = vmatpush.msra.mxu0 %v212
  %484 = vmatpush.msra.mxu0 %v211
  %485 = vmatpush.msra.mxu0 %v210
  %486 = vmatpush.msra.mxu0 %v209
  %487 = vmatpush.msra.mxu0 %v208
  %488 = vmatpush.msra.mxu0 %v207
  %489 = vmatpush.msra.mxu0 %v206
  %490 = vmatpush.msra.mxu0 %v205
  %491 = vmatpush.msra.mxu0 %v204
  %492 = vmatpush.msra.mxu0 %v203
  %493 = vmatpush.msra.mxu0 %v202
  %494 = vmatpush.msra.mxu0 %v201
  %495 = vmatpush.msra.mxu0 %v200
  %496 = vmatmul.f32.gmra.mxu0 %v479
  %v497 = vpop.f32.mrf.mxu0
  %v498 = vadd.f32 %v456, %v497
  %499 = vdwg.mxu0
  %v500 = vadd.f32 %v498, %v123
  %v501 = vtanh.pop %v500
  %s502 = scalar_lea.vmem [#allocation2], 40
  %v503 = vld [vmem:[%s502] sm:$0xff]
  %504 = vmatpush.msra.mxu0 %v141
  %505 = vmatpush.msra.mxu0 %v140
  %506 = vmatpush.msra.mxu0 %v139
  %507 = vmatpush.msra.mxu0 %v138
  %508 = vmatpush.msra.mxu0 %v137
  %509 = vmatpush.msra.mxu0 %v136
  %510 = vmatpush.msra.mxu0 %v135
  %511 = vmatpush.msra.mxu0 %v134
  %512 = vmatpush.msra.mxu0 %v133
  %513 = vmatpush.msra.mxu0 %v132
  %514 = vmatpush.msra.mxu0 %v131
  %515 = vmatpush.msra.mxu0 %v130
  %516 = vmatpush.msra.mxu0 %v129
  %517 = vmatpush.msra.mxu0 %v128
  %518 = vmatpush.msra.mxu0 %v127
  %519 = vmatpush.msra.mxu0 %v126
  %520 = vmatmul.f32.gmra.mxu0 %v501
  %v521 = vpop.f32.mrf.mxu0
  %v522 = vadd.f32 0.0, %v521
  %523 = vdwg.mxu0
  %524 = vmatpush.msra.mxu0 %v177
  %525 = vmatpush.msra.mxu0 %v176
  %526 = vmatpush.msra.mxu0 %v175
  %527 = vmatpush.msra.mxu0 %v174
  %528 = vmatpush.msra.mxu0 %v173
  %529 = vmatpush.msra.mxu0 %v172
  %530 = vmatpush.msra.mxu0 %v171
  %531 = vmatpush.msra.mxu0 %v170
  %532 = vmatpush.msra.mxu0 %v169
  %533 = vmatpush.msra.mxu0 %v168
  %534 = vmatpush.msra.mxu0 %v167
  %535 = vmatpush.msra.mxu0 %v166
  %536 = vmatpush.msra.mxu0 %v165
  %537 = vmatpush.msra.mxu0 %v164
  %538 = vmatpush.msra.mxu0 %v163
  %539 = vmatpush.msra.mxu0 %v162
  %540 = vmatmul.f32.gmra.mxu0 %v479
  %v541 = vpop.f32.mrf.mxu0
  %v542 = vadd.f32 0.0, %v541
  %543 = vdwg.mxu0
  %v544 = vadd.f32 %v503, %v542
  %v545 = vtanh.pop %v544
  %546 = vmatpush.msra.mxu0 %v215
  %547 = vmatpush.msra.mxu0 %v214
  %548 = vmatpush.msra.mxu0 %v213
  %549 = vmatpush.msra.mxu0 %v212
  %550 = vmatpush.msra.mxu0 %v211
  %551 = vmatpush.msra.mxu0 %v210
  %552 = vmatpush.msra.mxu0 %v209
  %553 = vmatpush.msra.mxu0 %v208
  %554 = vmatpush.msra.mxu0 %v207
  %555 = vmatpush.msra.mxu0 %v206
  %556 = vmatpush.msra.mxu0 %v205
  %557 = vmatpush.msra.mxu0 %v204
  %558 = vmatpush.msra.mxu0 %v203
  %559 = vmatpush.msra.mxu0 %v202
  %560 = vmatpush.msra.mxu0 %v201
  %561 = vmatpush.msra.mxu0 %v200
  %562 = vmatmul.f32.gmra.mxu0 %v545
  %v563 = vpop.f32.mrf.mxu0
  %v564 = vadd.f32 %v522, %v563
  %565 = vdwg.mxu0
  %v566 = vadd.f32 %v564, %v123
  %v567 = vtanh.pop %v566
  %s568 = scalar_lea.vmem [#allocation2], 48
  %v569 = vld [vmem:[%s568] sm:$0xff]
  %570 = vmatpush.msra.mxu0 %v141
  %571 = vmatpush.msra.mxu0 %v140
  %572 = vmatpush.msra.mxu0 %v139
  %573 = vmatpush.msra.mxu0 %v138
  %574 = vmatpush.msra.mxu0 %v137
  %575 = vmatpush.msra.mxu0 %v136
  %576 = vmatpush.msra.mxu0 %v135
  %577 = vmatpush.msra.mxu0 %v134
  %578 = vmatpush.msra.mxu0 %v133
  %579 = vmatpush.msra.mxu0 %v132
  %580 = vmatpush.msra.mxu0 %v131
  %581 = vmatpush.msra.mxu0 %v130
  %582 = vmatpush.msra.mxu0 %v129
  %583 = vmatpush.msra.mxu0 %v128
  %584 = vmatpush.msra.mxu0 %v127
  %585 = vmatpush.msra.mxu0 %v126
  %586 = vmatmul.f32.gmra.mxu0 %v567
  %v587 = vpop.f32.mrf.mxu0
  %v588 = vadd.f32 0.0, %v587
  %589 = vdwg.mxu0
  %590 = vmatpush.msra.mxu0 %v177
  %591 = vmatpush.msra.mxu0 %v176
  %592 = vmatpush.msra.mxu0 %v175
  %593 = vmatpush.msra.mxu0 %v174
  %594 = vmatpush.msra.mxu0 %v173
  %595 = vmatpush.msra.mxu0 %v172
  %596 = vmatpush.msra.mxu0 %v171
  %597 = vmatpush.msra.mxu0 %v170
  %598 = vmatpush.msra.mxu0 %v169
  %599 = vmatpush.msra.mxu0 %v168
  %600 = vmatpush.msra.mxu0 %v167
  %601 = vmatpush.msra.mxu0 %v166
  %602 = vmatpush.msra.mxu0 %v165
  %603 = vmatpush.msra.mxu0 %v164
  %604 = vmatpush.msra.mxu0 %v163
  %605 = vmatpush.msra.mxu0 %v162
  %606 = vmatmul.f32.gmra.mxu0 %v545
  %v607 = vpop.f32.mrf.mxu0
  %v608 = vadd.f32 0.0, %v607
  %609 = vdwg.mxu0
  %v610 = vadd.f32 %v569, %v608
  %v611 = vtanh.pop %v610
  %612 = vmatpush.msra.mxu0 %v215
  %613 = vmatpush.msra.mxu0 %v214
  %614 = vmatpush.msra.mxu0 %v213
  %615 = vmatpush.msra.mxu0 %v212
  %616 = vmatpush.msra.mxu0 %v211
  %617 = vmatpush.msra.mxu0 %v210
  %618 = vmatpush.msra.mxu0 %v209
  %619 = vmatpush.msra.mxu0 %v208
  %620 = vmatpush.msra.mxu0 %v207
  %621 = vmatpush.msra.mxu0 %v206
  %622 = vmatpush.msra.mxu0 %v205
  %623 = vmatpush.msra.mxu0 %v204
  %624 = vmatpush.msra.mxu0 %v203
  %625 = vmatpush.msra.mxu0 %v202
  %626 = vmatpush.msra.mxu0 %v201
  %627 = vmatpush.msra.mxu0 %v200
  %628 = vmatmul.f32.gmra.mxu0 %v611
  %v629 = vpop.f32.mrf.mxu0
  %v630 = vadd.f32 %v588, %v629
  %631 = vdwg.mxu0
  %v632 = vadd.f32 %v630, %v123
  %v633 = vtanh.pop %v632
  %s634 = scalar_lea.vmem [#allocation2], 56
  %v635 = vld [vmem:[%s634] sm:$0xff]
  %636 = vmatpush.msra.mxu0 %v141
  %637 = vmatpush.msra.mxu0 %v140
  %638 = vmatpush.msra.mxu0 %v139
  %639 = vmatpush.msra.mxu0 %v138
  %640 = vmatpush.msra.mxu0 %v137
  %641 = vmatpush.msra.mxu0 %v136
  %642 = vmatpush.msra.mxu0 %v135
  %643 = vmatpush.msra.mxu0 %v134
  %644 = vmatpush.msra.mxu0 %v133
  %645 = vmatpush.msra.mxu0 %v132
  %646 = vmatpush.msra.mxu0 %v131
  %647 = vmatpush.msra.mxu0 %v130
  %648 = vmatpush.msra.mxu0 %v129
  %649 = vmatpush.msra.mxu0 %v128
  %650 = vmatpush.msra.mxu0 %v127
  %651 = vmatpush.msra.mxu0 %v126
  %652 = vmatmul.f32.gmra.mxu0 %v633
  %v653 = vpop.f32.mrf.mxu0
  %v654 = vadd.f32 0.0, %v653
  %655 = vdwg.mxu0
  %656 = vmatpush.msra.mxu0 %v177
  %657 = vmatpush.msra.mxu0 %v176
  %658 = vmatpush.msra.mxu0 %v175
  %659 = vmatpush.msra.mxu0 %v174
  %660 = vmatpush.msra.mxu0 %v173
  %661 = vmatpush.msra.mxu0 %v172
  %662 = vmatpush.msra.mxu0 %v171
  %663 = vmatpush.msra.mxu0 %v170
  %664 = vmatpush.msra.mxu0 %v169
  %665 = vmatpush.msra.mxu0 %v168
  %666 = vmatpush.msra.mxu0 %v167
  %667 = vmatpush.msra.mxu0 %v166
  %668 = vmatpush.msra.mxu0 %v165
  %669 = vmatpush.msra.mxu0 %v164
  %670 = vmatpush.msra.mxu0 %v163
  %671 = vmatpush.msra.mxu0 %v162
  %672 = vmatmul.f32.gmra.mxu0 %v611
  %v673 = vpop.f32.mrf.mxu0
  %v674 = vadd.f32 0.0, %v673
  %675 = vdwg.mxu0
  %v676 = vadd.f32 %v635, %v674
  %v677 = vtanh.pop %v676
  %678 = vmatpush.msra.mxu0 %v215
  %679 = vmatpush.msra.mxu0 %v214
  %680 = vmatpush.msra.mxu0 %v213
  %681 = vmatpush.msra.mxu0 %v212
  %682 = vmatpush.msra.mxu0 %v211
  %683 = vmatpush.msra.mxu0 %v210
  %684 = vmatpush.msra.mxu0 %v209
  %685 = vmatpush.msra.mxu0 %v208
  %686 = vmatpush.msra.mxu0 %v207
  %687 = vmatpush.msra.mxu0 %v206
  %688 = vmatpush.msra.mxu0 %v205
  %689 = vmatpush.msra.mxu0 %v204
  %690 = vmatpush.msra.mxu0 %v203
  %691 = vmatpush.msra.mxu0 %v202
  %692 = vmatpush.msra.mxu0 %v201
  %693 = vmatpush.msra.mxu0 %v200
  %694 = vmatmul.f32.gmra.mxu0 %v677
  %v695 = vpop.f32.mrf.mxu0
  %v696 = vadd.f32 %v654, %v695
  %697 = vdwg.mxu0
  %v698 = vadd.f32 %v696, %v123
  %v699 = vtanh.pop %v698
  %v700 = vld [vmem:[%s7] sm:$0x1]
  %v702 = vperm.slane %v700, 0
  %v704 = vmul.f32 %v699, %v702
  %705 = vadd.xlane.f32.xlu0 %v704
  %v706 = vpop.xlane.xlu0 %705
  %s707 = sld [smem:[#allocation3]]
  %v708 = vstv %s707
  %v709 = vadd.f32 %v706, %v708
  %710 = vst [vmem:[%s9] sm:$0xff] %v709
  // Predicated region
  $region38: #{rnn_model_forward.1} parent=0 // pred_check
    _
  $region39: #{rnn_model_forward.1} parent=0 // pred_check_branch
    %712 = sbr.rel (0) target = $region41
  $region40: #{rnn_model_forward.1} parent=0 // pred_region
    _
  $region41: #{rnn_model_forward.1} parent=0 // pred_fallthru
    _
  // Predicated region
  $region42: #{rnn_model_forward.1} parent=0 // pred_check
    _
  $region43: #{rnn_model_forward.1} parent=0 // pred_check_branch
    %714 = sbr.rel (0) target = $region45
  $region44: #{rnn_model_forward.1} parent=0 // pred_region
    _
  $region45: #{rnn_model_forward.1} parent=0 // pred_fallthru
    _

</llo_original>
